<compile_context>
chip_gen: v6e
topology: v6e:2x2x1
jax: 0.10.0
libtpu: 0.0.40
codegen_flags: <defaults>
</compile_context>

<pallas_src>
import jax
import jax.numpy as jnp
from jax.experimental import pallas as pl
from jax.experimental.pallas import tpu as pltpu

_PACK = 8  # batch rows packed per lane-row (8 * embedding_dim = 128 lanes for emb=16)


def _round_up(n, m):
    return ((n + m - 1) // m) * m


def _encoder_kernel(x_ref, w1_ref, b1_ref, w2_ref, b2_ref, o_ref):
    # x arrives in its HBM dtype; cast to the compute dtype in vregs (not in the wrapper).
    x = x_ref[...].astype(w1_ref.dtype)
    # fc1 on the MXU with f32 accumulation (weights are block-diagonal over the 8-row pack).
    h = jnp.dot(x, w1_ref[...], preferred_element_type=jnp.float32)
    # Bias add + ReLU in f32 on the VPU (v5e has no bf16 VALU).
    h = jnp.maximum(h + b1_ref[...], 0.0)
    # fc2: downcast the activation to the weight dtype only right before feeding the MXU.
    y = jnp.dot(h.astype(w2_ref.dtype), w2_ref[...], preferred_element_type=jnp.float32)
    # Lane-dense (block_rows, 128) store -> unmasked vst + contiguous DMA writeback.
    o_ref[...] = (y + b2_ref[...]).astype(o_ref.dtype)


def _choose_block_rows(rows, block_batch):
    """Pick the packed-row tile size (1 packed row == _PACK batch rows)."""
    max_block = max(1, block_batch // _PACK)
    if rows <= max_block:
        if rows >= 256:
            # Big single-tile problems: split into 2 steps so both v7x TensorCores get work
            # (batch axis is "parallel"); on v5e/v6e (1 TC) this split is a measured no-op.
            return _round_up(pl.cdiv(rows, 2), 8)
        return rows  # full-extent block: no (8,128) divisibility constraint
    return max(8, _round_up(max_block, 8))


def vqvae_encoder(x, w1, b1, w2, b2, *, block_batch=4096, compute_dtype=jnp.bfloat16):
    """relu(x @ w1 + b1) @ w2 + b2.  Weights are (in_features, out_features), i.e. the
    transpose of torch.nn.Linear.weight.  Weights/activations are computed in
    `compute_dtype` (bf16 by default) with f32 accumulation -- an intentional precision
    trade-off; pass compute_dtype=jnp.float32 for exact f32 Linear semantics."""
    batch, input_dim = x.shape
    hidden_dim = w1.shape[1]
    embedding_dim = w2.shape[1]
    out_dtype = x.dtype
    cd = jnp.dtype(compute_dtype)

    padded_batch = _round_up(batch, _PACK)
    if padded_batch != batch:
        # TODO(synk): ragged (batch % 8 != 0) costs one extra HBM pass over x for the pad;
        # the common aligned case below is a zero-copy relabel of the same bytes.
        x = jnp.pad(x, ((0, padded_batch - batch), (0, 0)))
    rows = padded_batch // _PACK
    xp = x.reshape(rows, _PACK * input_dim)  # contiguous row-major reshape: free relabel

    # Tiny VMEM-resident operands: block-diagonal weights + tiled f32 biases.  This makes
    # the packed-row formulation exactly equal to the per-row Linear (zero blocks add 0.0).
    w1b = jnp.kron(jnp.eye(_PACK, dtype=cd), w1.astype(cd))   # (8*in,  8*hidden)
    w2b = jnp.kron(jnp.eye(_PACK, dtype=cd), w2.astype(cd))   # (8*hid, 8*emb)
    b1b = jnp.tile(b1.astype(jnp.float32), _PACK).reshape(1, _PACK * hidden_dim)
    b2b = jnp.tile(b2.astype(jnp.float32), _PACK).reshape(1, _PACK * embedding_dim)

    x_item = jnp.dtype(x.dtype).itemsize
    o_item = jnp.dtype(out_dtype).itemsize

    block_rows = _choose_block_rows(rows, block_batch)

    # Corrected VMEM accounting: every block is lane-dense (widths are multiples of 128 or
    # full-extent), so no lane-padding factors -- just double-buffered streams + residents.
    def _footprint(br):
        stream = 2 * br * _PACK * (input_dim * x_item + embedding_dim * o_item)
        resident = 2 * (w1b.size + w2b.size) * cd.itemsize + 2 * (b1b.size + b2b.size) * 4
        return stream + resident

    while block_rows > 8 and _footprint(block_rows) > 24 * 1024 * 1024:
        block_rows = max(8, _round_up(block_rows // 2, 8))
    vmem_limit = min(32 * 1024 * 1024,
                     max(16 * 1024 * 1024, int(1.5 * _footprint(block_rows))))

    grid = (pl.cdiv(rows, block_rows),)  # ragged last block handled by Pallas masking

    out = pl.pallas_call(
        _encoder_kernel,
        out_shape=jax.ShapeDtypeStruct((rows, _PACK * embedding_dim), out_dtype),
        grid=grid,
        in_specs=[
            pl.BlockSpec((block_rows, _PACK * input_dim), lambda i: (i, 0)),          # x tile
            pl.BlockSpec((_PACK * input_dim, _PACK * hidden_dim), lambda i: (0, 0)),  # W1 (resident)
            pl.BlockSpec((1, _PACK * hidden_dim), lambda i: (0, 0)),                  # b1
            pl.BlockSpec((_PACK * hidden_dim, _PACK * embedding_dim), lambda i: (0, 0)),  # W2
            pl.BlockSpec((1, _PACK * embedding_dim), lambda i: (0, 0)),                   # b2
        ],
        out_specs=pl.BlockSpec((block_rows, _PACK * embedding_dim), lambda i: (i, 0)),
        compiler_params=pltpu.CompilerParams(
            dimension_semantics=("parallel",),
            vmem_limit_bytes=vmem_limit,
        ),
    )(xp, w1b, b1b, w2b, b2b)

    out = out.reshape(padded_batch, embedding_dim)  # free relabel back to (batch, emb)
    if padded_batch != batch:
        out = out[:batch]
    return out


if __name__ == "__main__":
    # Small shapes implied by the module: Linear(input_dim, hidden) -> Linear(hidden, embedding).
    batch, input_dim, hidden_dim, embedding_dim = 200, 64, 32, 16

    key = jax.random.PRNGKey(0)
    kx, kw1, kb1, kw2, kb2 = jax.random.split(key, 5)

    x = jax.random.normal(kx, (batch, input_dim), dtype=jnp.float32)
    w1 = jax.random.normal(kw1, (input_dim, hidden_dim), dtype=jnp.float32) * 0.1
    b1 = jax.random.normal(kb1, (hidden_dim,), dtype=jnp.float32) * 0.1
    w2 = jax.random.normal(kw2, (hidden_dim, embedding_dim), dtype=jnp.float32) * 0.1
    b2 = jax.random.normal(kb2, (embedding_dim,), dtype=jnp.float32) * 0.1

    ref_f32 = jnp.maximum(x @ w1 + b1, 0.0) @ w2 + b2

    # f32 compute path, single big tile: tight check vs pure-JAX reference.
    out_f32 = jax.block_until_ready(
        vqvae_encoder(x, w1, b1, w2, b2, compute_dtype=jnp.float32))
    assert out_f32.shape == (batch, embedding_dim)
    assert jnp.allclose(out_f32, ref_f32, atol=1e-4, rtol=1e-4), "f32 single-tile mismatch"

    # f32 compute path, tiny tile: multi-step pipelined grid with a ragged (masked) last block.
    out_multi = jax.block_until_ready(
        vqvae_encoder(x, w1, b1, w2, b2, block_batch=64, compute_dtype=jnp.float32))
    assert jnp.allclose(out_multi, ref_f32, atol=1e-4, rtol=1e-4), "f32 multi-tile mismatch"

    # Default bf16 compute path: check vs a matching bf16-cast reference.
    out_bf16 = jax.block_until_ready(vqvae_encoder(x, w1, b1, w2, b2))
    xb, w1c, w2c = (a.astype(jnp.bfloat16) for a in (x, w1, w2))
    h_ref = jnp.maximum(jnp.dot(xb, w1c, preferred_element_type=jnp.float32) + b1, 0.0)
    ref_bf16 = jnp.dot(h_ref.astype(jnp.bfloat16), w2c, preferred_element_type=jnp.float32) + b2
    assert out_bf16.shape == (batch, embedding_dim)
    assert jnp.allclose(out_bf16.astype(jnp.float32), ref_bf16, atol=2e-2, rtol=2e-2), \
        "bf16 path mismatch vs reference"

    # Ragged batch (not a multiple of 8) exercises the (rare) pad fallback.
    out_ragged = jax.block_until_ready(
        vqvae_encoder(x[:13], w1, b1, w2, b2, compute_dtype=jnp.float32))
    assert jnp.allclose(out_ragged, ref_f32[:13], atol=1e-4, rtol=1e-4), "ragged-batch mismatch"

    print("KERNEL_OK")
</pallas_src>

<mosaic_0001>
module attributes {stable_mosaic.version = 11 : i64} {
  func.func @_encoder_kernel(%arg0: i32, %arg1: memref<25x512xf32, #tpu.memory_space<vmem>>, %arg2: memref<512x256xf32, #tpu.memory_space<vmem>>, %arg3: memref<1x256xf32, #tpu.memory_space<vmem>>, %arg4: memref<256x128xf32, #tpu.memory_space<vmem>>, %arg5: memref<1x128xf32, #tpu.memory_space<vmem>>, %arg6: memref<25x128xf32, #tpu.memory_space<vmem>>) attributes {dimension_semantics = [#tpu.dimension_semantics<parallel>], iteration_bounds = array<i64: 1>, scalar_prefetch = 0 : i64, scratch_operands = 0 : i64, tpu.core_type = #tpu.core_type<tc>, window_params = [{transform_indices = @transform_0, window_bounds = array<i64: 25, 512>}, {pipeline_mode = #tpu.pipeline_mode<synchronous>, transform_indices = @transform_1, window_bounds = array<i64: 512, 256>}, {pipeline_mode = #tpu.pipeline_mode<synchronous>, transform_indices = @transform_2, window_bounds = array<i64: 1, 256>}, {pipeline_mode = #tpu.pipeline_mode<synchronous>, transform_indices = @transform_3, window_bounds = array<i64: 256, 128>}, {pipeline_mode = #tpu.pipeline_mode<synchronous>, transform_indices = @transform_4, window_bounds = array<i64: 1, 128>}, {transform_indices = @transform_5, window_bounds = array<i64: 25, 128>}]} {
    %c0 = arith.constant 0 : index
    %c0_0 = arith.constant 0 : index
    %0 = vector.load %arg1[%c0, %c0_0] : memref<25x512xf32, #tpu.memory_space<vmem>>, vector<25x512xf32>
    %c0_1 = arith.constant 0 : index
    %c0_2 = arith.constant 0 : index
    %1 = vector.load %arg2[%c0_1, %c0_2] : memref<512x256xf32, #tpu.memory_space<vmem>>, vector<512x256xf32>
    %cst = arith.constant dense<0.000000e+00> : vector<25x256xf32>
    %2 = tpu.matmul %0, %1, %cst {dimension_numbers = #tpu.dot_dimension_numbers<[1], [0], [0], [1], [0, 0, 1, 1], [], []>} : vector<25x512xf32>, vector<512x256xf32>, vector<25x256xf32> -> vector<25x256xf32>
    %c0_3 = arith.constant 0 : index
    %c0_4 = arith.constant 0 : index
    %3 = vector.load %arg3[%c0_3, %c0_4] : memref<1x256xf32, #tpu.memory_space<vmem>>, vector<1x256xf32>
    %4 = vector.broadcast %3 : vector<1x256xf32> to vector<25x256xf32>
    %5 = arith.addf %2, %4 : vector<25x256xf32>
    %cst_5 = arith.constant 0.000000e+00 : f32
    %6 = vector.broadcast %cst_5 : f32 to vector<25x256xf32>
    %7 = arith.maximumf %5, %6 : vector<25x256xf32>
    %c0_6 = arith.constant 0 : index
    %c0_7 = arith.constant 0 : index
    %8 = vector.load %arg4[%c0_6, %c0_7] : memref<256x128xf32, #tpu.memory_space<vmem>>, vector<256x128xf32>
    %cst_8 = arith.constant dense<0.000000e+00> : vector<25x128xf32>
    %9 = tpu.matmul %7, %8, %cst_8 {dimension_numbers = #tpu.dot_dimension_numbers<[1], [0], [0], [1], [0, 0, 1, 1], [], []>} : vector<25x256xf32>, vector<256x128xf32>, vector<25x128xf32> -> vector<25x128xf32>
    %c0_9 = arith.constant 0 : index
    %c0_10 = arith.constant 0 : index
    %10 = vector.load %arg5[%c0_9, %c0_10] : memref<1x128xf32, #tpu.memory_space<vmem>>, vector<1x128xf32>
    %11 = vector.broadcast %10 : vector<1x128xf32> to vector<25x128xf32>
    %12 = arith.addf %9, %11 : vector<25x128xf32>
    %c0_11 = arith.constant 0 : index
    %c0_12 = arith.constant 0 : index
    %13 = vector.load %arg6[%c0_11, %c0_12] : memref<25x128xf32, #tpu.memory_space<vmem>>, vector<25x128xf32>
    tpu.vector_store %arg6[%c0_11, %c0_12], %12 {strides = array<i32>} : memref<25x128xf32, #tpu.memory_space<vmem>>, vector<25x128xf32>,
    return
  }
  func.func @transform_0(%arg0: i32) -> (i32, i32) {
    %c0_i32 = arith.constant 0 : i32
    %c0_i32_0 = arith.constant 0 : i32
    return %arg0, %c0_i32 : i32, i32
  }
  func.func @transform_1(%arg0: i32) -> (i32, i32) {
    %c0_i32 = arith.constant 0 : i32
    %c0_i32_0 = arith.constant 0 : i32
    %c0_i32_1 = arith.constant 0 : i32
    return %c0_i32, %c0_i32_0 : i32, i32
  }
  func.func @transform_2(%arg0: i32) -> (i32, i32) {
    %c0_i32 = arith.constant 0 : i32
    %c0_i32_0 = arith.constant 0 : i32
    %c0_i32_1 = arith.constant 0 : i32
    return %c0_i32, %c0_i32_0 : i32, i32
  }
  func.func @transform_3(%arg0: i32) -> (i32, i32) {
    %c0_i32 = arith.constant 0 : i32
    %c0_i32_0 = arith.constant 0 : i32
    %c0_i32_1 = arith.constant 0 : i32
    return %c0_i32, %c0_i32_0 : i32, i32
  }
  func.func @transform_4(%arg0: i32) -> (i32, i32) {
    %c0_i32 = arith.constant 0 : i32
    %c0_i32_0 = arith.constant 0 : i32
    %c0_i32_1 = arith.constant 0 : i32
    return %c0_i32, %c0_i32_0 : i32, i32
  }
  func.func @transform_5(%arg0: i32) -> (i32, i32) {
    %c0_i32 = arith.constant 0 : i32
    %c0_i32_0 = arith.constant 0 : i32
    return %arg0, %c0_i32 : i32, i32
  }
}

</mosaic_0001>

<llo_original>
// kernel: tpu_custom_call.1
$region0: #{tpu_custom_call.1}
  #allocation0 [shape = 'u32[]', space=smem, size = 0x4, offset = 0x4, fixed_abs, tag = 'smem constant byte address 0x4 - core index']
  #allocation1 [shape = 'u32[144,128]{1,0:T(1,128)}', space=vmem, size = 0x12000, scoped, tag = 'internal scratch']
  %s0 = inlined_call_operand.hbm [shape: f32[25,512], index: 0, kind: input, shape index: {}]
  %s1 = inlined_call_operand.hbm [shape: f32[512,256], index: 1, kind: input, shape index: {}]
  %s2 = inlined_call_operand.vmem [shape: f32[1,256], index: 2, kind: input, shape index: {}]
  %s3 = inlined_call_operand.hbm [shape: f32[256,128], index: 3, kind: input, shape index: {}]
  %s4 = inlined_call_operand.vmem [shape: f32[1,128], index: 4, kind: input, shape index: {}]
  %s5 = inlined_call_operand.hbm [shape: f32[25,128], index: 5, kind: output, shape index: {}]
  %s6 = sld [smem:[#allocation0]]
  $region42: #{tpu_custom_call.1} parent=0
    _
  %s8 = ssub.s32 1, %s6
  %s9 = scalar_select 0, %s8, %s6
  $region1: #{tpu_custom_call.1} parent=0
    #allocation2 [shape = 'u8[65536]{0}', space=vmem, size = 0x10000, scoped, tag = 'input window, operand 0, single buffered']
    #allocation3 [shape = 's32[1]{0}', space=sflag, size = 0x4, scoped, tag = 'scoped memory for tpu_custom_call.1']
    #allocation4 [shape = 's32[1]{0}', space=sflag, size = 0x4, scoped, tag = 'scoped memory for tpu_custom_call.1']
    #allocation5 [shape = 'u8[524288]{0}', space=vmem, size = 0x80000, scoped, tag = 'input window, operand 1, single buffered']
    #allocation6 [shape = 's32[1]{0}', space=sflag, size = 0x4, scoped, tag = 'scoped memory for tpu_custom_call.1']
    #allocation7 [shape = 'u8[131072]{0}', space=vmem, size = 0x20000, scoped, tag = 'input window, operand 3, single buffered']
    #allocation8 [shape = 'u8[16384]{0}', space=vmem, size = 0x4000, scoped, tag = 'output window, operand 0, single buffered']
    %10 = vsyncpa [#allocation3], 0
    %11 = vsyncpa [#allocation6], 0
    %12 = vsyncpa [#allocation4], 0
    // Predicated region
    $region2: #{tpu_custom_call.1} parent=1 // pred_check
      _
    $region3: #{tpu_custom_call.1} parent=1 // pred_check_branch
      %14 = sbr.rel (0) target = $region5
    $region4: #{tpu_custom_call.1} parent=1 // pred_region
      %s16 = ssub.s32 2048, 2048
      %17 = vsyncadd [#allocation3], %s16
      %s18 = sshll.u32 [#allocation2], 4
      %s19 = int_to_ptr.vmem [resolvable:$true] %s18
      %24 = dma.hbm_to_vmem [thread:$0]  %s0, 2048, %s19, [#allocation3], 512, 512, 32
    $region5: #{tpu_custom_call.1} parent=1 // pred_fallthru
      _
    // Predicated region
    $region6: #{tpu_custom_call.1} parent=1 // pred_check
      _
    $region7: #{tpu_custom_call.1} parent=1 // pred_check_branch
      %26 = sbr.rel (0) target = $region9
    $region8: #{tpu_custom_call.1} parent=1 // pred_region
      %s28 = ssub.s32 16384, 16384
      %29 = vsyncadd [#allocation6], %s28
      %s30 = sshll.u32 [#allocation5], 4
      %s31 = int_to_ptr.vmem [resolvable:$true] %s30
      %36 = dma.hbm_to_vmem [thread:$0]  %s1, 16384, %s31, [#allocation6], 256, 256, 16
    $region9: #{tpu_custom_call.1} parent=1 // pred_fallthru
      _
    // Predicated region
    $region10: #{tpu_custom_call.1} parent=1 // pred_check
      _
    $region11: #{tpu_custom_call.1} parent=1 // pred_check_branch
      %38 = sbr.rel (0) target = $region13
    $region12: #{tpu_custom_call.1} parent=1 // pred_region
      _
    $region13: #{tpu_custom_call.1} parent=1 // pred_fallthru
      _
    // Predicated region
    $region14: #{tpu_custom_call.1} parent=1 // pred_check
      _
    $region15: #{tpu_custom_call.1} parent=1 // pred_check_branch
      %40 = sbr.rel (0) target = $region17
    $region16: #{tpu_custom_call.1} parent=1 // pred_region
      %s42 = ssub.s32 4096, 4096
      %43 = vsyncadd [#allocation6], %s42
      %s44 = sshll.u32 [#allocation7], 4
      %s45 = int_to_ptr.vmem [resolvable:$true] %s44
      %50 = dma.hbm_to_vmem [thread:$0]  %s3, 4096, %s45, [#allocation6], 128, 128, 8
    $region17: #{tpu_custom_call.1} parent=1 // pred_fallthru
      _
    // Predicated region
    $region18: #{tpu_custom_call.1} parent=1 // pred_check
      _
    $region19: #{tpu_custom_call.1} parent=1 // pred_check_branch
      %52 = sbr.rel (0) target = $region21
    $region20: #{tpu_custom_call.1} parent=1 // pred_region
      _
    $region21: #{tpu_custom_call.1} parent=1 // pred_fallthru
      _
    // Predicated region
    $region22: #{tpu_custom_call.1} parent=1 // pred_check
      _
    $region23: #{tpu_custom_call.1} parent=1 // pred_check_branch
      %54 = sbr.rel (0) target = $region25
    $region24: #{tpu_custom_call.1} parent=1 // pred_region
      %55 = dma.done [#allocation3], 2048
    $region25: #{tpu_custom_call.1} parent=1 // pred_fallthru
      _
    // Predicated region
    $region26: #{tpu_custom_call.1} parent=1 // pred_check
      _
    $region27: #{tpu_custom_call.1} parent=1 // pred_check_branch
      %57 = sbr.rel (0) target = $region29
    $region28: #{tpu_custom_call.1} parent=1 // pred_region
      %58 = dma.done [#allocation6], 16384
    $region29: #{tpu_custom_call.1} parent=1 // pred_fallthru
      _
    // Predicated region
    $region30: #{tpu_custom_call.1} parent=1 // pred_check
      _
    $region31: #{tpu_custom_call.1} parent=1 // pred_check_branch
      %60 = sbr.rel (0) target = $region33
    $region32: #{tpu_custom_call.1} parent=1 // pred_region
      %61 = dma.done [#allocation6], 4096
    $region33: #{tpu_custom_call.1} parent=1 // pred_fallthru
      _
    %v62 = vld [vmem:[#allocation2] sm:$0xff]
    %v63 = vld [vmem:[#allocation2 + $0x8] sm:$0xff]
    %v64 = vld [vmem:[#allocation2 + $0x10] sm:$0xff]
    %v65 = vld [vmem:[#allocation2 + $0x18] sm:$0xff]
    %v66 = vld [vmem:[#allocation2 + $0x20] sm:$0xff]
    %v67 = vld [vmem:[#allocation2 + $0x28] sm:$0xff]
    %v68 = vld [vmem:[#allocation2 + $0x30] sm:$0xff]
    %v69 = vld [vmem:[#allocation2 + $0x38] sm:$0xff]
    %v70 = vld [vmem:[#allocation2 + $0x40] sm:$0xff]
    %v71 = vld [vmem:[#allocation2 + $0x48] sm:$0xff]
    %v72 = vld [vmem:[#allocation2 + $0x50] sm:$0xff]
    %v73 = vld [vmem:[#allocation2 + $0x58] sm:$0xff]
    %v74 = vld [vmem:[#allocation2 + $0x60] sm:$0x1]
    %v75 = vld [vmem:[#allocation2 + $0x68] sm:$0x1]
    %v76 = vld [vmem:[#allocation2 + $0x70] sm:$0x1]
    %v77 = vld [vmem:[#allocation2 + $0x78] sm:$0x1]
    %v78 = vld [vmem:[#allocation5] sm:$0xff]
    %v79 = vld [vmem:[#allocation5 + $0x8] sm:$0xff]
    %v80 = vld [vmem:[#allocation5 + $0x10] sm:$0xff]
    %v81 = vld [vmem:[#allocation5 + $0x18] sm:$0xff]
    %v82 = vld [vmem:[#allocation5 + $0x20] sm:$0xff]
    %v83 = vld [vmem:[#allocation5 + $0x28] sm:$0xff]
    %v84 = vld [vmem:[#allocation5 + $0x30] sm:$0xff]
    %v85 = vld [vmem:[#allocation5 + $0x38] sm:$0xff]
    %v86 = vld [vmem:[#allocation5 + $0x40] sm:$0xff]
    %v87 = vld [vmem:[#allocation5 + $0x48] sm:$0xff]
    %v88 = vld [vmem:[#allocation5 + $0x50] sm:$0xff]
    %v89 = vld [vmem:[#allocation5 + $0x58] sm:$0xff]
    %v90 = vld [vmem:[#allocation5 + $0x60] sm:$0xff]
    %v91 = vld [vmem:[#allocation5 + $0x68] sm:$0xff]
    %v92 = vld [vmem:[#allocation5 + $0x70] sm:$0xff]
    %v93 = vld [vmem:[#allocation5 + $0x78] sm:$0xff]
    %v94 = vld [vmem:[#allocation5 + $0x80] sm:$0xff]
    %v95 = vld [vmem:[#allocation5 + $0x88] sm:$0xff]
    %v96 = vld [vmem:[#allocation5 + $0x90] sm:$0xff]
    %v97 = vld [vmem:[#allocation5 + $0x98] sm:$0xff]
    %v98 = vld [vmem:[#allocation5 + $0xa0] sm:$0xff]
    %v99 = vld [vmem:[#allocation5 + $0xa8] sm:$0xff]
    %v100 = vld [vmem:[#allocation5 + $0xb0] sm:$0xff]
    %v101 = vld [vmem:[#allocation5 + $0xb8] sm:$0xff]
    %v102 = vld [vmem:[#allocation5 + $0xc0] sm:$0xff]
    %v103 = vld [vmem:[#allocation5 + $0xc8] sm:$0xff]
    %v104 = vld [vmem:[#allocation5 + $0xd0] sm:$0xff]
    %v105 = vld [vmem:[#allocation5 + $0xd8] sm:$0xff]
    %v106 = vld [vmem:[#allocation5 + $0xe0] sm:$0xff]
    %v107 = vld [vmem:[#allocation5 + $0xe8] sm:$0xff]
    %v108 = vld [vmem:[#allocation5 + $0xf0] sm:$0xff]
    %v109 = vld [vmem:[#allocation5 + $0xf8] sm:$0xff]
    %v110 = vld [vmem:[#allocation5 + $0x100] sm:$0xff]
    %v111 = vld [vmem:[#allocation5 + $0x108] sm:$0xff]
    %v112 = vld [vmem:[#allocation5 + $0x110] sm:$0xff]
    %v113 = vld [vmem:[#allocation5 + $0x118] sm:$0xff]
    %v114 = vld [vmem:[#allocation5 + $0x120] sm:$0xff]
    %v115 = vld [vmem:[#allocation5 + $0x128] sm:$0xff]
    %v116 = vld [vmem:[#allocation5 + $0x130] sm:$0xff]
    %v117 = vld [vmem:[#allocation5 + $0x138] sm:$0xff]
    %v118 = vld [vmem:[#allocation5 + $0x140] sm:$0xff]
    %v119 = vld [vmem:[#allocation5 + $0x148] sm:$0xff]
    %v120 = vld [vmem:[#allocation5 + $0x150] sm:$0xff]
    %v121 = vld [vmem:[#allocation5 + $0x158] sm:$0xff]
    %v122 = vld [vmem:[#allocation5 + $0x160] sm:$0xff]
    %v123 = vld [vmem:[#allocation5 + $0x168] sm:$0xff]
    %v124 = vld [vmem:[#allocation5 + $0x170] sm:$0xff]
    %v125 = vld [vmem:[#allocation5 + $0x178] sm:$0xff]
    %v126 = vld [vmem:[#allocation5 + $0x180] sm:$0xff]
    %v127 = vld [vmem:[#allocation5 + $0x188] sm:$0xff]
    %v128 = vld [vmem:[#allocation5 + $0x190] sm:$0xff]
    %v129 = vld [vmem:[#allocation5 + $0x198] sm:$0xff]
    %v130 = vld [vmem:[#allocation5 + $0x1a0] sm:$0xff]
    %v131 = vld [vmem:[#allocation5 + $0x1a8] sm:$0xff]
    %v132 = vld [vmem:[#allocation5 + $0x1b0] sm:$0xff]
    %v133 = vld [vmem:[#allocation5 + $0x1b8] sm:$0xff]
    %v134 = vld [vmem:[#allocation5 + $0x1c0] sm:$0xff]
    %v135 = vld [vmem:[#allocation5 + $0x1c8] sm:$0xff]
    %v136 = vld [vmem:[#allocation5 + $0x1d0] sm:$0xff]
    %v137 = vld [vmem:[#allocation5 + $0x1d8] sm:$0xff]
    %v138 = vld [vmem:[#allocation5 + $0x1e0] sm:$0xff]
    %v139 = vld [vmem:[#allocation5 + $0x1e8] sm:$0xff]
    %v140 = vld [vmem:[#allocation5 + $0x1f0] sm:$0xff]
    %v141 = vld [vmem:[#allocation5 + $0x1f8] sm:$0xff]
    %v142 = vld [vmem:[#allocation5 + $0x200] sm:$0xff]
    %v143 = vld [vmem:[#allocation5 + $0x208] sm:$0xff]
    %v144 = vld [vmem:[#allocation5 + $0x210] sm:$0xff]
    %v145 = vld [vmem:[#allocation5 + $0x218] sm:$0xff]
    %v146 = vld [vmem:[#allocation5 + $0x220] sm:$0xff]
    %v147 = vld [vmem:[#allocation5 + $0x228] sm:$0xff]
    %v148 = vld [vmem:[#allocation5 + $0x230] sm:$0xff]
    %v149 = vld [vmem:[#allocation5 + $0x238] sm:$0xff]
    %v150 = vld [vmem:[#allocation5 + $0x240] sm:$0xff]
    %v151 = vld [vmem:[#allocation5 + $0x248] sm:$0xff]
    %v152 = vld [vmem:[#allocation5 + $0x250] sm:$0xff]
    %v153 = vld [vmem:[#allocation5 + $0x258] sm:$0xff]
    %v154 = vld [vmem:[#allocation5 + $0x260] sm:$0xff]
    %v155 = vld [vmem:[#allocation5 + $0x268] sm:$0xff]
    %v156 = vld [vmem:[#allocation5 + $0x270] sm:$0xff]
    %v157 = vld [vmem:[#allocation5 + $0x278] sm:$0xff]
    %v158 = vld [vmem:[#allocation5 + $0x280] sm:$0xff]
    %v159 = vld [vmem:[#allocation5 + $0x288] sm:$0xff]
    %v160 = vld [vmem:[#allocation5 + $0x290] sm:$0xff]
    %v161 = vld [vmem:[#allocation5 + $0x298] sm:$0xff]
    %v162 = vld [vmem:[#allocation5 + $0x2a0] sm:$0xff]
    %v163 = vld [vmem:[#allocation5 + $0x2a8] sm:$0xff]
    %v164 = vld [vmem:[#allocation5 + $0x2b0] sm:$0xff]
    %v165 = vld [vmem:[#allocation5 + $0x2b8] sm:$0xff]
    %v166 = vld [vmem:[#allocation5 + $0x2c0] sm:$0xff]
    %v167 = vld [vmem:[#allocation5 + $0x2c8] sm:$0xff]
    %v168 = vld [vmem:[#allocation5 + $0x2d0] sm:$0xff]
    %v169 = vld [vmem:[#allocation5 + $0x2d8] sm:$0xff]
    %v170 = vld [vmem:[#allocation5 + $0x2e0] sm:$0xff]
    %v171 = vld [vmem:[#allocation5 + $0x2e8] sm:$0xff]
    %v172 = vld [vmem:[#allocation5 + $0x2f0] sm:$0xff]
    %v173 = vld [vmem:[#allocation5 + $0x2f8] sm:$0xff]
    %v174 = vld [vmem:[#allocation5 + $0x300] sm:$0xff]
    %v175 = vld [vmem:[#allocation5 + $0x308] sm:$0xff]
    %v176 = vld [vmem:[#allocation5 + $0x310] sm:$0xff]
    %v177 = vld [vmem:[#allocation5 + $0x318] sm:$0xff]
    %v178 = vld [vmem:[#allocation5 + $0x320] sm:$0xff]
    %v179 = vld [vmem:[#allocation5 + $0x328] sm:$0xff]
    %v180 = vld [vmem:[#allocation5 + $0x330] sm:$0xff]
    %v181 = vld [vmem:[#allocation5 + $0x338] sm:$0xff]
    %v182 = vld [vmem:[#allocation5 + $0x340] sm:$0xff]
    %v183 = vld [vmem:[#allocation5 + $0x348] sm:$0xff]
    %v184 = vld [vmem:[#allocation5 + $0x350] sm:$0xff]
    %v185 = vld [vmem:[#allocation5 + $0x358] sm:$0xff]
    %v186 = vld [vmem:[#allocation5 + $0x360] sm:$0xff]
    %v187 = vld [vmem:[#allocation5 + $0x368] sm:$0xff]
    %v188 = vld [vmem:[#allocation5 + $0x370] sm:$0xff]
    %v189 = vld [vmem:[#allocation5 + $0x378] sm:$0xff]
    %v190 = vld [vmem:[#allocation5 + $0x380] sm:$0xff]
    %v191 = vld [vmem:[#allocation5 + $0x388] sm:$0xff]
    %v192 = vld [vmem:[#allocation5 + $0x390] sm:$0xff]
    %v193 = vld [vmem:[#allocation5 + $0x398] sm:$0xff]
    %v194 = vld [vmem:[#allocation5 + $0x3a0] sm:$0xff]
    %v195 = vld [vmem:[#allocation5 + $0x3a8] sm:$0xff]
    %v196 = vld [vmem:[#allocation5 + $0x3b0] sm:$0xff]
    %v197 = vld [vmem:[#allocation5 + $0x3b8] sm:$0xff]
    %v198 = vld [vmem:[#allocation5 + $0x3c0] sm:$0xff]
    %v199 = vld [vmem:[#allocation5 + $0x3c8] sm:$0xff]
    %v200 = vld [vmem:[#allocation5 + $0x3d0] sm:$0xff]
    %v201 = vld [vmem:[#allocation5 + $0x3d8] sm:$0xff]
    %v202 = vld [vmem:[#allocation5 + $0x3e0] sm:$0xff]
    %v203 = vld [vmem:[#allocation5 + $0x3e8] sm:$0xff]
    %v204 = vld [vmem:[#allocation5 + $0x3f0] sm:$0xff]
    %v205 = vld [vmem:[#allocation5 + $0x3f8] sm:$0xff]
    %v206 = vld [vmem:[%s2] sm:$0x3]
    %v208 = vlaneseq
    %v209 = vshrl.u32 %v208, 7
    %v210 = vsub.s32 0, %v209
    %v211 = vrot.slane %v206, %v210
    %v212 = vlaneseq
    %v213 = vshrl.u32 %v212, 7
    %v214 = vsub.s32 1, %v213
    %v215 = vrot.slane %v206, %v214
    %218 = vmatprep.subr.mxu0 %v109
    %219 = vmatpush1.msra.mxu0 %v108
    %220 = vmatprep.subr.mxu0 %v107
    %221 = vmatpush1.msra.mxu0 %v106
    %222 = vmatprep.subr.mxu0 %v105
    %223 = vmatpush1.msra.mxu0 %v104
    %224 = vmatprep.subr.mxu0 %v103
    %225 = vmatpush1.msra.mxu0 %v102
    %226 = vmatprep.subr.mxu0 %v101
    %227 = vmatpush1.msra.mxu0 %v100
    %228 = vmatprep.subr.mxu0 %v99
    %229 = vmatpush1.msra.mxu0 %v98
    %230 = vmatprep.subr.mxu0 %v97
    %231 = vmatpush1.msra.mxu0 %v96
    %232 = vmatprep.subr.mxu0 %v95
    %233 = vmatpush1.msra.mxu0 %v94
    %234 = vmatprep.subr.mxu0 %v93
    %235 = vmatpush1.msra.mxu0 %v92
    %236 = vmatprep.subr.mxu0 %v91
    %237 = vmatpush1.msra.mxu0 %v90
    %238 = vmatprep.subr.mxu0 %v89
    %239 = vmatpush1.msra.mxu0 %v88
    %240 = vmatprep.subr.mxu0 %v87
    %241 = vmatpush1.msra.mxu0 %v86
    %242 = vmatprep.subr.mxu0 %v85
    %243 = vmatpush1.msra.mxu0 %v84
    %244 = vmatprep.subr.mxu0 %v83
    %245 = vmatpush1.msra.mxu0 %v82
    %246 = vmatprep.subr.mxu0 %v81
    %247 = vmatpush1.msra.mxu0 %v80
    %248 = vmatprep.subr.mxu0 %v79
    %249 = vmatpush1.msra.mxu0 %v78
    %250 = vmatprep.subr.mxu0 %v141
    %251 = vmatpush2.msra.mxu0 %v140
    %252 = vmatprep.subr.mxu0 %v139
    %253 = vmatpush2.msra.mxu0 %v138
    %254 = vmatprep.subr.mxu0 %v137
    %255 = vmatpush2.msra.mxu0 %v136
    %256 = vmatprep.subr.mxu0 %v135
    %257 = vmatpush2.msra.mxu0 %v134
    %258 = vmatprep.subr.mxu0 %v133
    %259 = vmatpush2.msra.mxu0 %v132
    %260 = vmatprep.subr.mxu0 %v131
    %261 = vmatpush2.msra.mxu0 %v130
    %262 = vmatprep.subr.mxu0 %v129
    %263 = vmatpush2.msra.mxu0 %v128
    %264 = vmatprep.subr.mxu0 %v127
    %265 = vmatpush2.msra.mxu0 %v126
    %266 = vmatprep.subr.mxu0 %v125
    %267 = vmatpush2.msra.mxu0 %v124
    %268 = vmatprep.subr.mxu0 %v123
    %269 = vmatpush2.msra.mxu0 %v122
    %270 = vmatprep.subr.mxu0 %v121
    %271 = vmatpush2.msra.mxu0 %v120
    %272 = vmatprep.subr.mxu0 %v119
    %273 = vmatpush2.msra.mxu0 %v118
    %274 = vmatprep.subr.mxu0 %v117
    %275 = vmatpush2.msra.mxu0 %v116
    %276 = vmatprep.subr.mxu0 %v115
    %277 = vmatpush2.msra.mxu0 %v114
    %278 = vmatprep.subr.mxu0 %v113
    %279 = vmatpush2.msra.mxu0 %v112
    %280 = vmatprep.subr.mxu0 %v111
    %281 = vmatpush2.msra.mxu0 %v110
    %282 = vmatprep.mubr.f32.mxu0 %v63
    %283 = vmatmul.mubr.f32.gmra.mxu0 %v62
    %v284 = vpop.f32.mrf.mxu0
    %v285 = vadd.f32 %v211, %v284
    %v286 = vpop.f32.mrf.mxu0
    %v287 = vadd.f32 %v215, %v286
    %288 = vmatprep.mubr.f32.mxu0 %v67
    %289 = vmatmul.mubr.f32.gmra.mxu0 %v66
    %v290 = vpop.f32.mrf.mxu0
    %v291 = vadd.f32 %v211, %v290
    %v292 = vpop.f32.mrf.mxu0
    %v293 = vadd.f32 %v215, %v292
    %294 = vmatprep.mubr.f32.mxu0 %v71
    %295 = vmatmul.mubr.f32.gmra.mxu0 %v70
    %v296 = vpop.f32.mrf.mxu0
    %v297 = vadd.f32 %v211, %v296
    %v298 = vpop.f32.mrf.mxu0
    %v299 = vadd.f32 %v215, %v298
    %300 = vmatprep.mubr.f32.mxu0 %v75
    %301 = vmatmul.mubr.f32.gmra.mxu0 %v74
    %v302 = vpop.f32.mrf.mxu0
    %v303 = vadd.f32 %v211, %v302
    %v304 = vpop.f32.mrf.mxu0
    %v305 = vadd.f32 %v215, %v304
    %306 = vdwg.mxu0
    %307 = vmatprep.subr.mxu0 %v173
    %308 = vmatpush1.msra.mxu0 %v172
    %309 = vmatprep.subr.mxu0 %v171
    %310 = vmatpush1.msra.mxu0 %v170
    %311 = vmatprep.subr.mxu0 %v169
    %312 = vmatpush1.msra.mxu0 %v168
    %313 = vmatprep.subr.mxu0 %v167
    %314 = vmatpush1.msra.mxu0 %v166
    %315 = vmatprep.subr.mxu0 %v165
    %316 = vmatpush1.msra.mxu0 %v164
    %317 = vmatprep.subr.mxu0 %v163
    %318 = vmatpush1.msra.mxu0 %v162
    %319 = vmatprep.subr.mxu0 %v161
    %320 = vmatpush1.msra.mxu0 %v160
    %321 = vmatprep.subr.mxu0 %v159
    %322 = vmatpush1.msra.mxu0 %v158
    %323 = vmatprep.subr.mxu0 %v157
    %324 = vmatpush1.msra.mxu0 %v156
    %325 = vmatprep.subr.mxu0 %v155
    %326 = vmatpush1.msra.mxu0 %v154
    %327 = vmatprep.subr.mxu0 %v153
    %328 = vmatpush1.msra.mxu0 %v152
    %329 = vmatprep.subr.mxu0 %v151
    %330 = vmatpush1.msra.mxu0 %v150
    %331 = vmatprep.subr.mxu0 %v149
    %332 = vmatpush1.msra.mxu0 %v148
    %333 = vmatprep.subr.mxu0 %v147
    %334 = vmatpush1.msra.mxu0 %v146
    %335 = vmatprep.subr.mxu0 %v145
    %336 = vmatpush1.msra.mxu0 %v144
    %337 = vmatprep.subr.mxu0 %v143
    %338 = vmatpush1.msra.mxu0 %v142
    %339 = vmatprep.subr.mxu0 %v205
    %340 = vmatpush2.msra.mxu0 %v204
    %341 = vmatprep.subr.mxu0 %v203
    %342 = vmatpush2.msra.mxu0 %v202
    %343 = vmatprep.subr.mxu0 %v201
    %344 = vmatpush2.msra.mxu0 %v200
    %345 = vmatprep.subr.mxu0 %v199
    %346 = vmatpush2.msra.mxu0 %v198
    %347 = vmatprep.subr.mxu0 %v197
    %348 = vmatpush2.msra.mxu0 %v196
    %349 = vmatprep.subr.mxu0 %v195
    %350 = vmatpush2.msra.mxu0 %v194
    %351 = vmatprep.subr.mxu0 %v193
    %352 = vmatpush2.msra.mxu0 %v192
    %353 = vmatprep.subr.mxu0 %v191
    %354 = vmatpush2.msra.mxu0 %v190
    %355 = vmatprep.subr.mxu0 %v189
    %356 = vmatpush2.msra.mxu0 %v188
    %357 = vmatprep.subr.mxu0 %v187
    %358 = vmatpush2.msra.mxu0 %v186
    %359 = vmatprep.subr.mxu0 %v185
    %360 = vmatpush2.msra.mxu0 %v184
    %361 = vmatprep.subr.mxu0 %v183
    %362 = vmatpush2.msra.mxu0 %v182
    %363 = vmatprep.subr.mxu0 %v181
    %364 = vmatpush2.msra.mxu0 %v180
    %365 = vmatprep.subr.mxu0 %v179
    %366 = vmatpush2.msra.mxu0 %v178
    %367 = vmatprep.subr.mxu0 %v177
    %368 = vmatpush2.msra.mxu0 %v176
    %369 = vmatprep.subr.mxu0 %v175
    %370 = vmatpush2.msra.mxu0 %v174
    %371 = vmatprep.mubr.f32.mxu0 %v65
    %372 = vmatmul.mubr.f32.gmra.mxu0 %v64
    %v373 = vpop.f32.mrf.mxu0
    %v374 = vadd.f32 %v285, %v373
    %v375 = vpop.f32.mrf.mxu0
    %v376 = vadd.f32 %v287, %v375
    %377 = vmatprep.mubr.f32.mxu0 %v69
    %378 = vmatmul.mubr.f32.gmra.mxu0 %v68
    %v379 = vpop.f32.mrf.mxu0
    %v380 = vadd.f32 %v291, %v379
    %v381 = vpop.f32.mrf.mxu0
    %v382 = vadd.f32 %v293, %v381
    %383 = vmatprep.mubr.f32.mxu0 %v73
    %384 = vmatmul.mubr.f32.gmra.mxu0 %v72
    %v385 = vpop.f32.mrf.mxu0
    %v386 = vadd.f32 %v297, %v385
    %v387 = vpop.f32.mrf.mxu0
    %v388 = vadd.f32 %v299, %v387
    %389 = vmatprep.mubr.f32.mxu0 %v77
    %390 = vmatmul.mubr.f32.gmra.mxu0 %v76
    %v391 = vpop.f32.mrf.mxu0
    %v392 = vadd.f32 %v303, %v391
    %v393 = vpop.f32.mrf.mxu0
    %v394 = vadd.f32 %v305, %v393
    %395 = vdwg.mxu0
    %v396 = vmax.f32 %v374, 0.0
    %v397 = vmax.f32 %v376, 0.0
    %v398 = vmax.f32 %v380, 0.0
    %v399 = vmax.f32 %v382, 0.0
    %v400 = vmax.f32 %v386, 0.0
    %v401 = vmax.f32 %v388, 0.0
    %v402 = vmax.f32 %v392, 0.0
    %v403 = vmax.f32 %v394, 0.0
    %v404 = vld [vmem:[#allocation7] sm:$0xff]
    %v405 = vld [vmem:[#allocation7 + $0x8] sm:$0xff]
    %v406 = vld [vmem:[#allocation7 + $0x10] sm:$0xff]
    %v407 = vld [vmem:[#allocation7 + $0x18] sm:$0xff]
    %v408 = vld [vmem:[#allocation7 + $0x20] sm:$0xff]
    %v409 = vld [vmem:[#allocation7 + $0x28] sm:$0xff]
    %v410 = vld [vmem:[#allocation7 + $0x30] sm:$0xff]
    %v411 = vld [vmem:[#allocation7 + $0x38] sm:$0xff]
    %v412 = vld [vmem:[#allocation7 + $0x40] sm:$0xff]
    %v413 = vld [vmem:[#allocation7 + $0x48] sm:$0xff]
    %v414 = vld [vmem:[#allocation7 + $0x50] sm:$0xff]
    %v415 = vld [vmem:[#allocation7 + $0x58] sm:$0xff]
    %v416 = vld [vmem:[#allocation7 + $0x60] sm:$0xff]
    %v417 = vld [vmem:[#allocation7 + $0x68] sm:$0xff]
    %v418 = vld [vmem:[#allocation7 + $0x70] sm:$0xff]
    %v419 = vld [vmem:[#allocation7 + $0x78] sm:$0xff]
    %v420 = vld [vmem:[#allocation7 + $0x80] sm:$0xff]
    %v421 = vld [vmem:[#allocation7 + $0x88] sm:$0xff]
    %v422 = vld [vmem:[#allocation7 + $0x90] sm:$0xff]
    %v423 = vld [vmem:[#allocation7 + $0x98] sm:$0xff]
    %v424 = vld [vmem:[#allocation7 + $0xa0] sm:$0xff]
    %v425 = vld [vmem:[#allocation7 + $0xa8] sm:$0xff]
    %v426 = vld [vmem:[#allocation7 + $0xb0] sm:$0xff]
    %v427 = vld [vmem:[#allocation7 + $0xb8] sm:$0xff]
    %v428 = vld [vmem:[#allocation7 + $0xc0] sm:$0xff]
    %v429 = vld [vmem:[#allocation7 + $0xc8] sm:$0xff]
    %v430 = vld [vmem:[#allocation7 + $0xd0] sm:$0xff]
    %v431 = vld [vmem:[#allocation7 + $0xd8] sm:$0xff]
    %v432 = vld [vmem:[#allocation7 + $0xe0] sm:$0xff]
    %v433 = vld [vmem:[#allocation7 + $0xe8] sm:$0xff]
    %v434 = vld [vmem:[#allocation7 + $0xf0] sm:$0xff]
    %v435 = vld [vmem:[#allocation7 + $0xf8] sm:$0xff]
    %v436 = vld [vmem:[%s4] sm:$0x1]
    %v438 = vlaneseq
    %v439 = vshrl.u32 %v438, 7
    %v440 = vsub.s32 0, %v439
    %v441 = vrot.slane %v436, %v440
    %443 = vmatprep.subr.mxu0 0.0
    %444 = vmatpush1.msra.mxu0 %v419
    %445 = vmatprep.subr.mxu0 0.0
    %446 = vmatpush1.msra.mxu0 %v418
    %447 = vmatprep.subr.mxu0 0.0
    %448 = vmatpush1.msra.mxu0 %v417
    %449 = vmatprep.subr.mxu0 0.0
    %450 = vmatpush1.msra.mxu0 %v416
    %451 = vmatprep.subr.mxu0 0.0
    %452 = vmatpush1.msra.mxu0 %v415
    %453 = vmatprep.subr.mxu0 0.0
    %454 = vmatpush1.msra.mxu0 %v414
    %455 = vmatprep.subr.mxu0 0.0
    %456 = vmatpush1.msra.mxu0 %v413
    %457 = vmatprep.subr.mxu0 0.0
    %458 = vmatpush1.msra.mxu0 %v412
    %459 = vmatprep.subr.mxu0 0.0
    %460 = vmatpush1.msra.mxu0 %v411
    %461 = vmatprep.subr.mxu0 0.0
    %462 = vmatpush1.msra.mxu0 %v410
    %463 = vmatprep.subr.mxu0 0.0
    %464 = vmatpush1.msra.mxu0 %v409
    %465 = vmatprep.subr.mxu0 0.0
    %466 = vmatpush1.msra.mxu0 %v408
    %467 = vmatprep.subr.mxu0 0.0
    %468 = vmatpush1.msra.mxu0 %v407
    %469 = vmatprep.subr.mxu0 0.0
    %470 = vmatpush1.msra.mxu0 %v406
    %471 = vmatprep.subr.mxu0 0.0
    %472 = vmatpush1.msra.mxu0 %v405
    %473 = vmatprep.subr.mxu0 0.0
    %474 = vmatpush1.msra.mxu0 %v404
    %475 = vmatprep.subr.mxu0 0.0
    %476 = vmatpush2.msra.mxu0 %v435
    %477 = vmatprep.subr.mxu0 0.0
    %478 = vmatpush2.msra.mxu0 %v434
    %479 = vmatprep.subr.mxu0 0.0
    %480 = vmatpush2.msra.mxu0 %v433
    %481 = vmatprep.subr.mxu0 0.0
    %482 = vmatpush2.msra.mxu0 %v432
    %483 = vmatprep.subr.mxu0 0.0
    %484 = vmatpush2.msra.mxu0 %v431
    %485 = vmatprep.subr.mxu0 0.0
    %486 = vmatpush2.msra.mxu0 %v430
    %487 = vmatprep.subr.mxu0 0.0
    %488 = vmatpush2.msra.mxu0 %v429
    %489 = vmatprep.subr.mxu0 0.0
    %490 = vmatpush2.msra.mxu0 %v428
    %491 = vmatprep.subr.mxu0 0.0
    %492 = vmatpush2.msra.mxu0 %v427
    %493 = vmatprep.subr.mxu0 0.0
    %494 = vmatpush2.msra.mxu0 %v426
    %495 = vmatprep.subr.mxu0 0.0
    %496 = vmatpush2.msra.mxu0 %v425
    %497 = vmatprep.subr.mxu0 0.0
    %498 = vmatpush2.msra.mxu0 %v424
    %499 = vmatprep.subr.mxu0 0.0
    %500 = vmatpush2.msra.mxu0 %v423
    %501 = vmatprep.subr.mxu0 0.0
    %502 = vmatpush2.msra.mxu0 %v422
    %503 = vmatprep.subr.mxu0 0.0
    %504 = vmatpush2.msra.mxu0 %v421
    %505 = vmatprep.subr.mxu0 0.0
    %506 = vmatpush2.msra.mxu0 %v420
    %507 = vmatprep.mubr.f32.mxu0 %v397
    %508 = vmatmul.mubr.f32.gmra.mxu0 %v396
    %v509 = vpop.f32.mrf.mxu0
    %v510 = vadd.f32 %v441, %v509
    %v511 = vpop.f32.mrf.mxu0
    %512 = vmatprep.mubr.f32.mxu0 %v399
    %513 = vmatmul.mubr.f32.gmra.mxu0 %v398
    %v514 = vpop.f32.mrf.mxu0
    %v515 = vadd.f32 %v441, %v514
    %v516 = vpop.f32.mrf.mxu0
    %517 = vmatprep.mubr.f32.mxu0 %v401
    %518 = vmatmul.mubr.f32.gmra.mxu0 %v400
    %v519 = vpop.f32.mrf.mxu0
    %v520 = vadd.f32 %v441, %v519
    %v521 = vpop.f32.mrf.mxu0
    %522 = vmatprep.mubr.f32.mxu0 %v403
    %523 = vmatmul.mubr.f32.gmra.mxu0 %v402
    %v524 = vpop.f32.mrf.mxu0
    %v525 = vadd.f32 %v441, %v524
    %v526 = vpop.f32.mrf.mxu0
    %527 = vdwg.mxu0
    %528 = vst [vmem:[#allocation8] sm:$0xff] %v510
    %529 = vst [vmem:[#allocation8 + $0x8] sm:$0xff] %v515
    %530 = vst [vmem:[#allocation8 + $0x10] sm:$0xff] %v520
    %531 = vst [vmem:[#allocation8 + $0x18] sm:$0x1] %v525
    // Predicated region
    $region34: #{tpu_custom_call.1} parent=1 // pred_check
      _
    $region35: #{tpu_custom_call.1} parent=1 // pred_check_branch
      %533 = sbr.rel (0) target = $region37
    $region36: #{tpu_custom_call.1} parent=1 // pred_region
      %s535 = ssub.s32 512, 512
      %536 = vsyncadd [#allocation4], %s535
      %s537 = sshll.u32 [#allocation8], 4
      %s538 = int_to_ptr.vmem [resolvable:$true] %s537
      %543 = dma.vmem_to_hbm [thread:$0]  %s538, 512, %s5, [#allocation4], 128, 128, 8
    $region37: #{tpu_custom_call.1} parent=1 // pred_fallthru
      _
    // Predicated region
    $region38: #{tpu_custom_call.1} parent=1 // pred_check
      _
    $region39: #{tpu_custom_call.1} parent=1 // pred_check_branch
      %545 = sbr.rel (0) target = $region41
    $region40: #{tpu_custom_call.1} parent=1 // pred_region
      %546 = dma.done [#allocation4], 512
    $region41: #{tpu_custom_call.1} parent=1 // pred_fallthru
      _
    %547 = vsyncpa [#allocation3], 1
    %548 = vsyncpa [#allocation6], 1
    %549 = vsyncpa [#allocation4], 1

</llo_original>
